<compile_context>
chip_gen: v7x
topology: tpu7x:2x2x1
jax: 0.10.0
libtpu: 0.0.40
codegen_flags: <defaults>
</compile_context>

<pallas_src>
import functools

import jax
import jax.numpy as jnp
from jax.experimental import pallas as pl
from jax.experimental.pallas import tpu as pltpu


def _focal_kernel(logits_ref, target_ref, out_ref, acc_ref, *,
                  gamma, ignore_index, hw, thw):
    j = pl.program_id(1)          # pixel-tile index (reduction axis)

    @pl.when(j == 0)
    def _():
        acc_ref[...] = jnp.zeros_like(acc_ref)

    x = logits_ref[0].astype(jnp.float32)          # (C, thw)  classes on sublanes
    t = target_ref[0]                              # (1, thw)  int32, pixels on lanes

    # Numerically-stable softmax pieces, reduced over the class (sublane) axis.
    m = jnp.max(x, axis=0, keepdims=True)          # (1, thw)
    z = x - m
    e = jnp.exp(z)
    s = jnp.sum(e, axis=0, keepdims=True)          # (1, thw) sum of exp
    lse = jnp.log(s)                               # (1, thw)

    # Gather the target class via a sublane-iota compare (no dynamic gather on TPU).
    # NOTE: assumes ignore_index >= C (true for 255 here); an ignored id < C would
    # match the compare before being masked out below.
    cls = jax.lax.broadcasted_iota(jnp.int32, x.shape, 0)   # (C, thw)
    onehot = cls == t
    z_t = jnp.sum(jnp.where(onehot, z, 0.0), axis=0, keepdims=True)   # (1, thw)
    e_t = jnp.sum(jnp.where(onehot, e, 0.0), axis=0, keepdims=True)   # exp(z_target)

    # Validity: real pixel (not block/lane padding) and not ignore_index.
    pix = j * thw + jax.lax.broadcasted_iota(jnp.int32, t.shape, 1)   # (1, thw)
    valid = (pix < hw) & (t != ignore_index)

    logpt = lse - z_t                  # = -log_softmax[target]  (>= 0)
    pt = e_t / s                       # = softmax[target]       (no exp/log round trip)
    d = 1.0 - pt

    # Focal factor: integer-gamma fast path (pure VPU multiplies, no exp/log and no
    # NaN risk from a float power of a slightly-negative base).
    if float(gamma) == int(gamma) and gamma >= 0:
        g = int(gamma)
        if g == 0:
            f = jnp.ones_like(d)
        else:
            f = d
            for _ in range(g - 1):
                f = f * d
    else:
        f = jnp.power(jnp.maximum(d, 0.0), gamma)

    loss = jnp.where(valid, f * logpt, 0.0)        # (1, thw); ignored/padded -> 0

    acc_ref[...] += loss                           # lane-shaped VPU accumulate

    @pl.when(j == pl.num_programs(1) - 1)
    def _():
        total = jnp.sum(acc_ref[...])              # one cross-lane reduce per batch elem
        out_ref[...] = jnp.broadcast_to(total, out_ref.shape)


def focal_loss(logits_nchw, target_nhw, *, gamma=2.0, ignore_index=255,
               size_average=True, tile_pixels=8192):
    """Pallas focal loss. logits: (N, C, H, W), target: (N, H, W) int."""
    N, C, H, W = logits_nchw.shape
    HW = H * W

    # Free reshapes only: no transpose and no dtype cast of the logits in HBM
    # (the cast to f32 happens inside the kernel on the VMEM tile).
    x = logits_nchw.reshape(N, C, HW)
    t = target_nhw.reshape(N, 1, HW).astype(jnp.int32)

    # Keep the lane (last) axis 128-aligned. For typical segmentation shapes
    # H*W is already a multiple of 128 and this is a no-op.
    HWp = pl.cdiv(HW, 128) * 128
    if HWp != HW:
        x = jnp.pad(x, ((0, 0), (0, 0), (0, HWp - HW)))
        t = jnp.pad(t, ((0, 0), (0, 0), (0, HWp - HW)),
                    constant_values=ignore_index)

    # Big lane-dense pixel tile: this kernel is HBM-bandwidth bound, so amortize
    # the per-grid-step overhead. Partial last blocks are handled by the in-kernel
    # pixel mask.
    thw = min(int(tile_pixels), HWp)
    thw = max(128, (thw // 128) * 128)
    grid = (N, pl.cdiv(HWp, thw))

    kernel = functools.partial(_focal_kernel, gamma=float(gamma),
                               ignore_index=int(ignore_index),
                               hw=int(HW), thw=int(thw))

    # One partial sum per batch element; the batch axis is "parallel" so v7x can
    # shard it across both TensorCores (no-op on single-TC v5e/v6e).
    partials = pl.pallas_call(
        kernel,
        out_shape=jax.ShapeDtypeStruct((N, 8, 128), jnp.float32),
        grid_spec=pltpu.PrefetchScalarGridSpec(
            num_scalar_prefetch=0,
            grid=grid,
            in_specs=[
                pl.BlockSpec((1, C, thw), lambda n, j: (n, 0, j)),   # logits tile
                pl.BlockSpec((1, 1, thw), lambda n, j: (n, 0, j)),   # target tile
            ],
            out_specs=pl.BlockSpec((1, 8, 128), lambda n, j: (n, 0, 0)),
            scratch_shapes=[pltpu.VMEM((1, thw), jnp.float32)],
        ),
        compiler_params=pltpu.CompilerParams(
            dimension_semantics=("parallel", "arbitrary")),
    )(x, t)

    total = jnp.sum(partials[:, 0, 0])
    # TODO(synk): class-weight (alpha) path of CrossEntropyLoss is not implemented
    # (module default alpha=None).
    if size_average:
        # torch .mean() divides by ALL pixels, including ignored ones.
        return total / jnp.float32(N * HW)
    return total


def _focal_loss_ref(logits_nchw, target_nhw, gamma=2.0, ignore_index=255,
                    size_average=True):
    """Pure-JAX reference mirroring the PyTorch module."""
    N, C, H, W = logits_nchw.shape
    x = jnp.transpose(logits_nchw, (0, 2, 3, 1)).reshape(-1, C).astype(jnp.float32)
    t = target_nhw.reshape(-1).astype(jnp.int32)
    logsm = jax.nn.log_softmax(x, axis=-1)
    safe_t = jnp.where(t == ignore_index, 0, t)
    nll = -jnp.take_along_axis(logsm, safe_t[:, None], axis=-1)[:, 0]
    logpt = jnp.where(t == ignore_index, 0.0, nll)
    pt = jnp.exp(-logpt)
    loss = (1.0 - pt) ** gamma * logpt
    return loss.mean() if size_average else loss.sum()


if __name__ == "__main__":
    key = jax.random.PRNGKey(0)
    k1, k2, k3 = jax.random.split(key, 3)

    N, C, H, W = 2, 4, 16, 16
    logits = jax.random.normal(k1, (N, C, H, W), dtype=jnp.float32)
    target = jax.random.randint(k2, (N, H, W), 0, C, dtype=jnp.int32)
    # Sprinkle some ignored pixels (ignore_index = 255).
    ignore_mask = jax.random.bernoulli(k3, 0.1, (N, H, W))
    target = jnp.where(ignore_mask, 255, target)

    out = focal_loss(logits, target, gamma=2.0, ignore_index=255,
                     size_average=True)
    out = jax.block_until_ready(out)

    ref = _focal_loss_ref(logits, target, gamma=2.0, ignore_index=255,
                          size_average=True)
    assert jnp.allclose(out, ref, rtol=1e-5, atol=1e-6), (out, ref)

    print("KERNEL_OK")
</pallas_src>

<mosaic_0001>
module attributes {stable_mosaic.version = 11 : i64} {
  func.func @_focal_kernel(%arg0: i32, %arg1: i32, %arg2: memref<1x4x256xf32, #tpu.memory_space<vmem>>, %arg3: memref<1x1x256xi32, #tpu.memory_space<vmem>>, %arg4: memref<1x8x128xf32, #tpu.memory_space<vmem>>, %arg5: memref<1x256xf32, #tpu.memory_space<vmem>>) attributes {dimension_semantics = [#tpu.dimension_semantics<parallel>, #tpu.dimension_semantics<arbitrary>], iteration_bounds = array<i64: 2, 1>, scalar_prefetch = 0 : i64, scratch_operands = 1 : i64, tpu.core_type = #tpu.core_type<tc>, window_params = [{transform_indices = @transform_0, window_bounds = array<i64: 1, 4, 256>}, {transform_indices = @transform_1, window_bounds = array<i64: 1, 1, 256>}, {transform_indices = @transform_2, window_bounds = array<i64: 1, 8, 128>}]} {
    %c0_i32 = arith.constant 0 : i32
    %0 = arith.cmpi eq, %arg1, %c0_i32 : i32
    %1 = arith.extui %0 : i1 to i32
    %c0_i32_0 = arith.constant 0 : i32
    %2 = arith.cmpi ne, %1, %c0_i32_0 : i32
    scf.if %2 {
      %cst_20 = arith.constant 0.000000e+00 : f32
      %49 = vector.broadcast %cst_20 : f32 to vector<1x256xf32>
      %c0_21 = arith.constant 0 : index
      %c0_22 = arith.constant 0 : index
      %50 = vector.load %arg5[%c0_21, %c0_22] : memref<1x256xf32, #tpu.memory_space<vmem>>, vector<1x256xf32>
      tpu.vector_store %arg5[%c0_21, %c0_22], %49 {strides = array<i32>} : memref<1x256xf32, #tpu.memory_space<vmem>>, vector<1x256xf32>,
    } else {
    }
    %c0 = arith.constant 0 : index
    %c0_1 = arith.constant 0 : index
    %c0_2 = arith.constant 0 : index
    %3 = vector.load %arg2[%c0, %c0_1, %c0_2] : memref<1x4x256xf32, #tpu.memory_space<vmem>>, vector<1x4x256xf32>
    %4 = vector.shape_cast %3 : vector<1x4x256xf32> to vector<4x256xf32>
    %c0_3 = arith.constant 0 : index
    %c0_4 = arith.constant 0 : index
    %c0_5 = arith.constant 0 : index
    %5 = vector.load %arg3[%c0_3, %c0_4, %c0_5] : memref<1x1x256xi32, #tpu.memory_space<vmem>>, vector<1x1x256xi32>
    %6 = vector.shape_cast %5 : vector<1x1x256xi32> to vector<1x256xi32>
    %cst = arith.constant dense<0xFF800000> : vector<256xf32>
    %7 = vector.multi_reduction <maximumf>, %4, %cst [0] : vector<4x256xf32> to vector<256xf32>
    %8 = vector.shape_cast %7 : vector<256xf32> to vector<1x256xf32>
    %9 = vector.broadcast %8 : vector<1x256xf32> to vector<4x256xf32>
    %10 = arith.subf %4, %9 : vector<4x256xf32>
    %11 = math.exp %10 : vector<4x256xf32>
    %cst_6 = arith.constant dense<0.000000e+00> : vector<256xf32>
    %12 = vector.multi_reduction <add>, %11, %cst_6 [0] : vector<4x256xf32> to vector<256xf32>
    %13 = vector.shape_cast %12 : vector<256xf32> to vector<1x256xf32>
    %14 = math.log %13 : vector<1x256xf32>
    %15 = tpu.iota {dimensions = array<i32: 0>} : vector<4x256xi32>
    %16 = vector.broadcast %6 : vector<1x256xi32> to vector<4x256xi32>
    %17 = arith.cmpi eq, %15, %16 : vector<4x256xi32>
    %cst_7 = arith.constant 0.000000e+00 : f32
    %18 = vector.broadcast %cst_7 : f32 to vector<4x256xf32>
    %19 = arith.select %17, %10, %18 : vector<4x256xi1>, vector<4x256xf32>
    %cst_8 = arith.constant dense<0.000000e+00> : vector<256xf32>
    %20 = vector.multi_reduction <add>, %19, %cst_8 [0] : vector<4x256xf32> to vector<256xf32>
    %21 = vector.shape_cast %20 : vector<256xf32> to vector<1x256xf32>
    %cst_9 = arith.constant 0.000000e+00 : f32
    %22 = vector.broadcast %cst_9 : f32 to vector<4x256xf32>
    %23 = arith.select %17, %11, %22 : vector<4x256xi1>, vector<4x256xf32>
    %cst_10 = arith.constant dense<0.000000e+00> : vector<256xf32>
    %24 = vector.multi_reduction <add>, %23, %cst_10 [0] : vector<4x256xf32> to vector<256xf32>
    %25 = vector.shape_cast %24 : vector<256xf32> to vector<1x256xf32>
    %c256_i32 = arith.constant 256 : i32
    %26 = arith.muli %arg1, %c256_i32 : i32
    %27 = tpu.iota {dimensions = array<i32: 1>} : vector<1x256xi32>
    %28 = vector.broadcast %26 : i32 to vector<1x256xi32>
    %29 = arith.addi %28, %27 : vector<1x256xi32>
    %c256_i32_11 = arith.constant 256 : i32
    %30 = vector.broadcast %c256_i32_11 : i32 to vector<1x256xi32>
    %31 = arith.cmpi slt, %29, %30 : vector<1x256xi32>
    %c255_i32 = arith.constant 255 : i32
    %32 = vector.broadcast %c255_i32 : i32 to vector<1x256xi32>
    %33 = arith.cmpi ne, %6, %32 : vector<1x256xi32>
    %34 = arith.andi %31, %33 : vector<1x256xi1>
    %35 = arith.subf %14, %21 : vector<1x256xf32>
    %36 = arith.divf %25, %13 : vector<1x256xf32>
    %cst_12 = arith.constant 1.000000e+00 : f32
    %37 = vector.broadcast %cst_12 : f32 to vector<1x256xf32>
    %38 = arith.subf %37, %36 : vector<1x256xf32>
    %39 = arith.mulf %38, %38 : vector<1x256xf32>
    %40 = arith.mulf %39, %35 : vector<1x256xf32>
    %cst_13 = arith.constant 0.000000e+00 : f32
    %41 = vector.broadcast %cst_13 : f32 to vector<1x256xf32>
    %42 = arith.select %34, %40, %41 : vector<1x256xi1>, vector<1x256xf32>
    %c0_14 = arith.constant 0 : index
    %c0_15 = arith.constant 0 : index
    %43 = vector.load %arg5[%c0_14, %c0_15] : memref<1x256xf32, #tpu.memory_space<vmem>>, vector<1x256xf32>
    %44 = arith.addf %43, %42 : vector<1x256xf32>
    %c0_16 = arith.constant 0 : index
    %c0_17 = arith.constant 0 : index
    %45 = vector.load %arg5[%c0_16, %c0_17] : memref<1x256xf32, #tpu.memory_space<vmem>>, vector<1x256xf32>
    tpu.vector_store %arg5[%c0_16, %c0_17], %44 {strides = array<i32>} : memref<1x256xf32, #tpu.memory_space<vmem>>, vector<1x256xf32>,
    %c0_i32_18 = arith.constant 0 : i32
    %46 = arith.cmpi eq, %arg1, %c0_i32_18 : i32
    %47 = arith.extui %46 : i1 to i32
    %c0_i32_19 = arith.constant 0 : i32
    %48 = arith.cmpi ne, %47, %c0_i32_19 : i32
    scf.if %48 {
      %c0_20 = arith.constant 0 : index
      %c0_21 = arith.constant 0 : index
      %49 = vector.load %arg5[%c0_20, %c0_21] : memref<1x256xf32, #tpu.memory_space<vmem>>, vector<1x256xf32>
      %50 = vector.shape_cast %49 : vector<1x256xf32> to vector<1x1x256xf32>
      %cst_22 = arith.constant dense<0.000000e+00> : vector<1xf32>
      %51 = vector.multi_reduction <add>, %50, %cst_22 [1, 2] : vector<1x1x256xf32> to vector<1xf32>
      %52 = vector.shape_cast %51 : vector<1xf32> to vector<1x1x1xf32>
      %53 = vector.extract %52[0, 0, 0] : f32 from vector<1x1x1xf32>
      %54 = vector.broadcast %53 : f32 to vector<1x8x128xf32>
      %c0_23 = arith.constant 0 : index
      %c0_24 = arith.constant 0 : index
      %c0_25 = arith.constant 0 : index
      %55 = vector.load %arg4[%c0_23, %c0_24, %c0_25] : memref<1x8x128xf32, #tpu.memory_space<vmem>>, vector<1x8x128xf32>
      tpu.vector_store %arg4[%c0_23, %c0_24, %c0_25], %54 {strides = array<i32>} : memref<1x8x128xf32, #tpu.memory_space<vmem>>, vector<1x8x128xf32>,
    } else {
    }
    return
  }
  func.func @transform_0(%arg0: i32, %arg1: i32) -> (i32, i32, i32) {
    %c0_i32 = arith.constant 0 : i32
    %c0_i32_0 = arith.constant 0 : i32
    return %arg0, %c0_i32, %arg1 : i32, i32, i32
  }
  func.func @transform_1(%arg0: i32, %arg1: i32) -> (i32, i32, i32) {
    %c0_i32 = arith.constant 0 : i32
    %c0_i32_0 = arith.constant 0 : i32
    return %arg0, %c0_i32, %arg1 : i32, i32, i32
  }
  func.func @transform_2(%arg0: i32, %arg1: i32) -> (i32, i32, i32) {
    %c0_i32 = arith.constant 0 : i32
    %c0_i32_0 = arith.constant 0 : i32
    %c0_i32_1 = arith.constant 0 : i32
    return %arg0, %c0_i32, %c0_i32_0 : i32, i32, i32
  }
}

</mosaic_0001>

<llo_original>
// kernel: tpu_custom_call.1
$region0: #{tpu_custom_call.1}
  #allocation0 [shape = 'u32[]', space=smem, size = 0x4, offset = 0x4, fixed_abs, tag = 'smem constant byte address 0x4 - core index']
  #allocation1 [shape = 'u32[144,128]{1,0:T(1,128)}', space=vmem, size = 0x12000, scoped, tag = 'internal scratch']
  #allocation2 [shape = 'f32[1,256]{1,0:T(1,128)}', space=vmem, size = 0x400, scoped, tag = 'scratch operand']
  %s0 = inlined_call_operand.hbm [shape: f32[2,4,256], index: 0, kind: input, shape index: {}]
  %s1 = inlined_call_operand.hbm [shape: s32[2,1,256], index: 1, kind: input, shape index: {}]
  %s2 = inlined_call_operand.hbm [shape: f32[2,8,128], index: 2, kind: output, shape index: {}]
  %s3 = sld [smem:[#allocation0]]
  $region57: #{tpu_custom_call.1} parent=0
    _
  %s5 = ssub.s32 1, %s3
  %s6 = scalar_select 0, %s5, %s3
  $region1: #{tpu_custom_call.1} parent=0
    #allocation3 [shape = 'u8[8192]{0}', space=vmem, size = 0x2000, scoped, tag = 'input window, operand 0']
    #allocation4 [shape = 's32[2]{0}', space=sflag, size = 0x8, scoped, tag = 'scoped memory for tpu_custom_call.1']
    #allocation5 [shape = 's32[2]{0}', space=sflag, size = 0x8, scoped, tag = 'scoped memory for tpu_custom_call.1']
    #allocation6 [shape = 'u8[2048]{0}', space=vmem, size = 0x800, scoped, tag = 'input window, operand 1']
    #allocation7 [shape = 's32[2]{0}', space=sflag, size = 0x8, scoped, tag = 'scoped memory for tpu_custom_call.1']
    #allocation8 [shape = 'u8[8192]{0}', space=vmem, size = 0x2000, scoped, tag = 'output window, operand 0']
    %7 = vsyncpa [#allocation4], 0
    %s8 = scalar_lea.sflag [#allocation4], 1
    %9 = vsyncpa %s8, 0
    %10 = vsyncpa [#allocation7], 0
    %s11 = scalar_lea.sflag [#allocation7], 1
    %12 = vsyncpa %s11, 0
    %13 = vsyncpa [#allocation5], 0
    %s14 = scalar_lea.sflag [#allocation5], 1
    %15 = vsyncpa %s14, 0
    loop: start=0, step=1, limit=4
    $region2: #{tpu_custom_call.1} parent=1 // loop_pre_header
      _
    $region3: #{tpu_custom_call.1} parent=1 // loop_header
      %s17 = sphi 0, %s21
      %p18 = scmp.ge.s32.totalorder %s17, 4
      %s24 = sphi 0, %s36
      %s25 = sphi 0, %s32
      %s26 = sphi 0, %s24
      %s27 = sphi 0, %s25
      %s28 = sphi 0, %s26
      %s29 = sphi 0, %s27
      %s41 = sphi 0, %s43
      %s44 = sphi 0, %s41
      %s45 = sphi 0, %s44
      %s61 = sphi 0, %s45
      %s69 = sphi 0, %s71
      %s72 = sphi 0, %s69
      %s73 = sphi 0, %s72
      %s89 = sphi 0, %s73
      %s95 = sphi 0, %s97
      %s98 = sphi 0, %s95
      %s99 = sphi 0, %s98
      %s115 = sphi 0, %s99
    $region4: #{tpu_custom_call.1} parent=1 // loop_header_branch
      %20 = sbr.rel (%p18) target = $region8
    $region5: #{tpu_custom_call.1} parent=1 // loop_body
      %s22 = ssub.s32 %s17, 1
      %s23 = ssub.s32 %s17, 2
      %s30 = sadd.s32 1, %s25
      %p31 = scmp.ge.s32.totalorder %s30, 1
      %s32 = scalar_select %p31, 0, %s30
      %s33 = sadd.s32 1, %s24
      %s34 = scalar_select %p31, %s33, %s24
      %p35 = scmp.ge.s32.totalorder %s34, 2
      %s36 = scalar_select %p35, 0, %s34
      %s37 = ssub.s32 %s24, %s36
      %s38 = ssub.s32 %s25, %s32
      %s39 = sor.u32 %s37, %s38
      %p40 = scmp.eq.s32.totalorder %s39, 0
      %s42 = sadd.s32 %s41, 1
      %s43 = scalar_select %p40, %s41, %s42
      %p46 = pneg %p40
      %p47 = scmp.eq.s32.totalorder %s17, 1
      %p48 = por %p46, %p47
      %p49 = scmp.ne.s32.totalorder %s41, %s44
      %p50 = scmp.eq.s32.totalorder %s17, 0
      %p51 = por %p49, %p50
      %p52 = scmp.ne.s32.totalorder %s41, %s44
      %p53 = scmp.eq.s32.totalorder %s22, 1
      %p54 = por %p52, %p53
      %p55 = scmp.ne.s32.totalorder %s44, %s45
      %p56 = scmp.eq.s32.totalorder %s22, 0
      %p57 = por %p55, %p56
      %p58 = scmp.ne.s32.totalorder %s44, %s45
      %p59 = scmp.eq.s32.totalorder %s23, 1
      %p60 = por %p58, %p59
      %p62 = scmp.ne.s32.totalorder %s45, %s61
      %p63 = scmp.eq.s32.totalorder %s23, 0
      %p64 = por %p62, %p63
      %s65 = ssub.s32 %s24, %s36
      %s66 = ssub.s32 %s25, %s32
      %s67 = sor.u32 %s65, %s66
      %p68 = scmp.eq.s32.totalorder %s67, 0
      %s70 = sadd.s32 %s69, 1
      %s71 = scalar_select %p68, %s69, %s70
      %p74 = pneg %p68
      %p75 = scmp.eq.s32.totalorder %s17, 1
      %p76 = por %p74, %p75
      %p77 = scmp.ne.s32.totalorder %s69, %s72
      %p78 = scmp.eq.s32.totalorder %s17, 0
      %p79 = por %p77, %p78
      %p80 = scmp.ne.s32.totalorder %s69, %s72
      %p81 = scmp.eq.s32.totalorder %s22, 1
      %p82 = por %p80, %p81
      %p83 = scmp.ne.s32.totalorder %s72, %s73
      %p84 = scmp.eq.s32.totalorder %s22, 0
      %p85 = por %p83, %p84
      %p86 = scmp.ne.s32.totalorder %s72, %s73
      %p87 = scmp.eq.s32.totalorder %s23, 1
      %p88 = por %p86, %p87
      %p90 = scmp.ne.s32.totalorder %s73, %s89
      %p91 = scmp.eq.s32.totalorder %s23, 0
      %p92 = por %p90, %p91
      %s93 = ssub.s32 %s24, %s36
      %p94 = scmp.eq.s32.totalorder %s93, 0
      %s96 = sadd.s32 %s95, 1
      %s97 = scalar_select %p94, %s95, %s96
      %p100 = pneg %p94
      %p101 = scmp.eq.s32.totalorder %s17, 1
      %p102 = por %p100, %p101
      %p103 = scmp.ne.s32.totalorder %s95, %s98
      %p104 = scmp.eq.s32.totalorder %s17, 0
      %p105 = por %p103, %p104
      %p106 = scmp.ne.s32.totalorder %s95, %s98
      %p107 = scmp.eq.s32.totalorder %s22, 1
      %p108 = por %p106, %p107
      %p109 = scmp.ne.s32.totalorder %s98, %s99
      %p110 = scmp.eq.s32.totalorder %s22, 0
      %p111 = por %p109, %p110
      %p112 = scmp.ne.s32.totalorder %s98, %s99
      %p113 = scmp.eq.s32.totalorder %s23, 1
      %p114 = por %p112, %p113
      %p116 = scmp.ne.s32.totalorder %s99, %s115
      %p117 = scmp.eq.s32.totalorder %s23, 0
      %p118 = por %p116, %p117
      %p119 = scmp.le.s32.totalorder 1, %s17
      %p120 = scmp.lt.s32.totalorder %s17, 3
      %p121 = pnand %p119, %p120
      %p122 = pneg %p121
      // Predicated region
      $region9: #{tpu_custom_call.1} parent=5 // pred_check
        _
      $region10: #{tpu_custom_call.1} parent=5 // pred_check_branch
        %124 = sbr.rel (%p121) target = $region12
      $region11: #{tpu_custom_call.1} parent=5 // pred_region
        %s125 = ssub.s32 %s17, 1
      $region12: #{tpu_custom_call.1} parent=5 // pred_fallthru
        _
      %p126 = scmp.lt.s32.totalorder %s17, 2
      // Predicated region
      $region13: #{tpu_custom_call.1} parent=5 // pred_check
        %p127 = pneg %p126
      $region14: #{tpu_custom_call.1} parent=5 // pred_check_branch
        %129 = sbr.rel (%p127) target = $region16
      $region15: #{tpu_custom_call.1} parent=5 // pred_region
        // Predicated region
        $region17: #{tpu_custom_call.1} parent=15 // pred_check
          %p130 = pneg %p51
        $region18: #{tpu_custom_call.1} parent=15 // pred_check_branch
          %132 = sbr.rel (%p130) target = $region20
        $region19: #{tpu_custom_call.1} parent=15 // pred_region
          %s133 = sand.u32 %s41, 1
          %s134 = scalar_lea.sflag [#allocation4], %s133
          %s135 = sand.u32 %s41, 1
          %s136 = smul.addr %s135, 8
          %s137 = scalar_lea.vmem [#allocation3], %s136
          %s138 = smul.u32 2, %s25
          %s140 = ssub.s32 128, 128
          %141 = vsyncadd %s134, %s140
          %s142 = smul.addr %s24, 2
          %s143 = sadd.s32 %s138, %s142
          %s144 = smul.addr %s143, 64
          %s145 = scalar_lea.hbm %s0, %s144
          %s147 = sshll.u32 %s137, 4
          %s148 = int_to_ptr.vmem [resolvable:$true] %s147
          %150 = dma.hbm_to_vmem [thread:$0]  %s145, 128, %s148, %s134
        $region20: #{tpu_custom_call.1} parent=15 // pred_fallthru
          _
        // Predicated region
        $region21: #{tpu_custom_call.1} parent=15 // pred_check
          %p151 = pneg %p79
        $region22: #{tpu_custom_call.1} parent=15 // pred_check_branch
          %153 = sbr.rel (%p151) target = $region24
        $region23: #{tpu_custom_call.1} parent=15 // pred_region
          %s154 = sand.u32 %s69, 1
          %s155 = scalar_lea.sflag [#allocation7], %s154
          %s156 = sand.u32 %s69, 1
          %s157 = smul.addr %s156, 2
          %s158 = scalar_lea.vmem [#allocation6], %s157
          %s159 = smul.u32 2, %s25
          %s161 = ssub.s32 32, 32
          %162 = vsyncadd %s155, %s161
          %s163 = smul.addr %s24, 2
          %s164 = sadd.s32 %s159, %s163
          %s165 = smul.addr %s164, 16
          %s166 = scalar_lea.hbm %s1, %s165
          %s168 = sshll.u32 %s158, 4
          %s169 = int_to_ptr.vmem [resolvable:$true] %s168
          %171 = dma.hbm_to_vmem [thread:$0]  %s166, 32, %s169, %s155
        $region24: #{tpu_custom_call.1} parent=15 // pred_fallthru
          _
      $region16: #{tpu_custom_call.1} parent=5 // pred_fallthru
        _
      %p172 = scmp.le.s32.totalorder 1, %s17
      %p173 = scmp.lt.s32.totalorder %s17, 3
      %p174 = pnand %p172, %p173
      %p175 = pneg %p174
      // Predicated region
      $region25: #{tpu_custom_call.1} parent=5 // pred_check
        _
      $region26: #{tpu_custom_call.1} parent=5 // pred_check_branch
        %177 = sbr.rel (%p174) target = $region28
      $region27: #{tpu_custom_call.1} parent=5 // pred_region
        %s178 = ssub.s32 %s17, 1
        %s179 = sand.u32 %s44, 1
        %s180 = scalar_lea.sflag [#allocation4], %s179
        %s181 = sand.u32 %s44, 1
        %s182 = smul.addr %s181, 8
        %s183 = scalar_lea.vmem [#allocation3], %s182
        // Predicated region
        $region29: #{tpu_custom_call.1} parent=27 // pred_check
          %p184 = pneg %p57
        $region30: #{tpu_custom_call.1} parent=27 // pred_check_branch
          %186 = sbr.rel (%p184) target = $region32
        $region31: #{tpu_custom_call.1} parent=27 // pred_region
          %187 = dma.done %s180, 128
        $region32: #{tpu_custom_call.1} parent=27 // pred_fallthru
          _
        %s188 = sand.u32 %s72, 1
        %s189 = scalar_lea.sflag [#allocation7], %s188
        %s190 = sand.u32 %s72, 1
        %s191 = smul.addr %s190, 2
        %s192 = scalar_lea.vmem [#allocation6], %s191
        // Predicated region
        $region33: #{tpu_custom_call.1} parent=27 // pred_check
          %p193 = pneg %p85
        $region34: #{tpu_custom_call.1} parent=27 // pred_check_branch
          %195 = sbr.rel (%p193) target = $region36
        $region35: #{tpu_custom_call.1} parent=27 // pred_region
          %196 = dma.done %s189, 32
        $region36: #{tpu_custom_call.1} parent=27 // pred_fallthru
          _
        %s197 = sand.u32 %s44, 1
        %s198 = scalar_lea.sflag [#allocation4], %s197
        %s199 = sand.u32 %s44, 1
        %s200 = smul.addr %s199, 8
        %s201 = scalar_lea.vmem [#allocation3], %s200
        %p202 = pneg %p57
        %p203 = pneg %p54
        %s204 = sand.u32 %s72, 1
        %s205 = scalar_lea.sflag [#allocation7], %s204
        %s206 = sand.u32 %s72, 1
        %s207 = smul.addr %s206, 2
        %s208 = scalar_lea.vmem [#allocation6], %s207
        %p209 = pneg %p85
        %p210 = pneg %p82
        %p211 = pneg %p111
        %p212 = pneg %p108
        %s213 = sand.u32 %s98, 1
        %s214 = scalar_lea.sflag [#allocation5], %s213
        %s215 = sand.u32 %s98, 1
        %s216 = smul.addr %s215, 8
        %s217 = scalar_lea.vmem [#allocation8], %s216
        %s218 = smul.u32 2, %s27
        %s219 = smul.u32 2, %s27
        %p220 = scmp.eq.s32.totalorder %s27, 0
        // Predicated region
        $region37: #{tpu_custom_call.1} parent=27 // pred_check
          %p221 = pneg %p220
        $region38: #{tpu_custom_call.1} parent=27 // pred_check_branch
          %223 = sbr.rel (%p221) target = $region40
        $region39: #{tpu_custom_call.1} parent=27 // pred_region
          %v224 = vlaneseq
          %vm225 = vcmp.ge.s32.totalorder %v224, 0
          %vm226 = vcmp.lt.s32.totalorder %v224, 256
          %vm227 = vmand %vm225, %vm226
          %228 = vst.msk [vmem:[#allocation2] sm:$0x3] %vm227, 0.0
        $region40: #{tpu_custom_call.1} parent=27 // pred_fallthru
          _
        %v229 = vld [vmem:[%s183] sm:$0xff]
        %v230 = vld [vmem:[%s192] sm:$0x3]
        %v232 = vcombine.high %v229, %v229
        %vm234 = vcmask 1043456
        %v235 = vsel %vm234, %v229, -inf
        %v236 = vrot.slane %v235, 4
        %v237 = vmax.f32 %v235, %v236
        %v238 = vrot.slane %v237, 2
        %v239 = vmax.f32 %v237, %v238
        %v240 = vrot.slane %v239, 1
        %v241 = vmax.f32 %v239, %v240
        %v242 = vsel %vm234, %v232, -inf
        %v243 = vrot.slane %v242, 4
        %v244 = vmax.f32 %v242, %v243
        %v245 = vrot.slane %v244, 2
        %v246 = vmax.f32 %v244, %v245
        %v247 = vrot.slane %v246, 1
        %v248 = vmax.f32 %v246, %v247
        %v251 = vcombine.low %v241, %v248
        %v253 = vsub.f32 %v229, %v251
        %v254 = vmul.f32 %v253, 1.442695
        %v255 = vpow.pop %v254
        %v257 = vcombine.high %v255, %v255
        %v259 = vsel %vm234, %v255, 0.0
        %v260 = vrot.slane %v259, 4
        %v261 = vadd.f32 %v259, %v260
        %v262 = vrot.slane %v261, 2
        %v263 = vadd.f32 %v261, %v262
        %v264 = vrot.slane %v263, 1
        %v265 = vadd.f32 %v263, %v264
        %v266 = vsel %vm234, %v257, 0.0
        %v267 = vrot.slane %v266, 4
        %v268 = vadd.f32 %v266, %v267
        %v269 = vrot.slane %v268, 2
        %v270 = vadd.f32 %v268, %v269
        %v271 = vrot.slane %v270, 1
        %v272 = vadd.f32 %v270, %v271
        %v273 = vlog2.pop %v265
        %v274 = vmul.f32 %v273, 0.6931472
        %v275 = vlog2.pop %v272
        %v276 = vmul.f32 %v275, 0.6931472
        %v277 = vlaneseq
        %v278 = vshrl.u32 %v277, 7
        %v279 = vlaneseq
        %v280 = vshrl.u32 %v279, 7
        %v281 = vsub.s32 0, %v280
        %v282 = vrot.slane %v230, %v281
        %v283 = vlaneseq
        %v284 = vshrl.u32 %v283, 7
        %v285 = vsub.s32 1, %v284
        %v286 = vrot.slane %v230, %v285
        %vm287 = vcmp.eq.s32.totalorder %v278, %v282
        %vm288 = vcmp.eq.s32.totalorder %v278, %v286
        %v290 = vcombine.high %v253, %v253
        %v292 = vsel %vm287, %v253, 0.0
        %v293 = vsel %vm288, %v290, 0.0
        %v294 = vsel %vm234, %v292, 0.0
        %v295 = vrot.slane %v294, 4
        %v296 = vadd.f32 %v294, %v295
        %v297 = vrot.slane %v296, 2
        %v298 = vadd.f32 %v296, %v297
        %v299 = vrot.slane %v298, 1
        %v300 = vadd.f32 %v298, %v299
        %v301 = vsel %vm234, %v293, 0.0
        %v302 = vrot.slane %v301, 4
        %v303 = vadd.f32 %v301, %v302
        %v304 = vrot.slane %v303, 2
        %v305 = vadd.f32 %v303, %v304
        %v306 = vrot.slane %v305, 1
        %v307 = vadd.f32 %v305, %v306
        %v308 = vsel %vm287, %v255, 0.0
        %v309 = vsel %vm288, %v257, 0.0
        %v310 = vsel %vm234, %v308, 0.0
        %v311 = vrot.slane %v310, 4
        %v312 = vadd.f32 %v310, %v311
        %v313 = vrot.slane %v312, 2
        %v314 = vadd.f32 %v312, %v313
        %v315 = vrot.slane %v314, 1
        %v316 = vadd.f32 %v314, %v315
        %v317 = vsel %vm234, %v309, 0.0
        %v318 = vrot.slane %v317, 4
        %v319 = vadd.f32 %v317, %v318
        %v320 = vrot.slane %v319, 2
        %v321 = vadd.f32 %v319, %v320
        %v322 = vrot.slane %v321, 1
        %v323 = vadd.f32 %v321, %v322
        %s324 = smul.u32 %s27, 256
        %v325 = vlaneseq
        %v326 = vand.u32 %v325, 127
        %v327 = vadd.s32 %v326, 128
        %v328 = vstv %s324
        %v329 = vadd.s32 %v328, %v326
        %v330 = vadd.s32 %v328, %v327
        %vm331 = vcmp.lt.s32.totalorder %v329, 256
        %vm332 = vcmp.lt.s32.totalorder %v330, 256
        %vm333 = vcmp.ne.s32.totalorder %v230, 255
        %v334 = vsel %vm333, 1, 0
        %v335 = vlaneseq
        %v336 = vshrl.u32 %v335, 7
        %v337 = vsub.s32 0, %v336
        %v338 = vrot.slane %v334, %v337
        %v339 = vlaneseq
        %v340 = vshrl.u32 %v339, 7
        %v341 = vsub.s32 1, %v340
        %v342 = vrot.slane %v334, %v341
        %vm343 = vcmp.ne.s32.totalorder %v338, 0
        %vm344 = vcmp.ne.s32.totalorder %v342, 0
        %vm345 = vmand %vm331, %vm343
        %vm346 = vmand %vm332, %vm344
        %v347 = vsub.f32 %v274, %v300
        %v348 = vsub.f32 %v276, %v307
        %v349 = vrcp.pop %v265
        %v350 = vmul.f32 %v316, %v349
        %v351 = vrcp.pop %v272
        %v352 = vmul.f32 %v323, %v351
        %v353 = vsub.f32 1.0, %v350
        %v354 = vsub.f32 1.0, %v352
        %v355 = vmul.f32 %v353, %v353
        %v356 = vmul.f32 %v354, %v354
        %v357 = vmul.f32 %v355, %v347
        %v358 = vmul.f32 %v356, %v348
        %v359 = vsel %vm345, %v357, 0.0
        %v360 = vsel %vm346, %v358, 0.0
        %v361 = vld [vmem:[#allocation2] sm:$0x3]
        %v364 = vcombine.low %v359, %v360
        %v366 = vunpack.c.l.s4 1966171168
        %v367 = vunpack.c.0.s8 %v366
        %v368 = vlaneseq
        %v369 = vshrl.u32 %v368, 7
        %v370 = vsub.s32 %v367, %v369
        %v371 = vrot.slane %v364, %v370
        %v373 = vunpack.c.l.s4 1966171168
        %v374 = vunpack.c.0.s8 %v373
        %v375 = vlaneseq
        %v376 = vshrl.u32 %v375, 7
        %v377 = vsub.s32 %v374, %v376
        %v378 = vrot.slane %v371, %v377
        %v380 = vadd.f32 %v361, %v378
        %v381 = vlaneseq
        %vm382 = vcmp.ge.s32.totalorder %v381, 0
        %vm383 = vcmp.lt.s32.totalorder %v381, 256
        %vm384 = vmand %vm382, %vm383
        %385 = vst.msk [vmem:[#allocation2] sm:$0x3] %vm384, %v380
        // Predicated region
        $region41: #{tpu_custom_call.1} parent=27 // pred_check
          %p386 = pneg %p220
        $region42: #{tpu_custom_call.1} parent=27 // pred_check_branch
          %388 = sbr.rel (%p386) target = $region44
        $region43: #{tpu_custom_call.1} parent=27 // pred_region
          %v389 = vld [vmem:[#allocation2] sm:$0x3]
          %v391 = vlaneseq
          %v392 = vshrl.u32 %v391, 7
          %v393 = vsub.s32 0, %v392
          %v394 = vrot.slane %v389, %v393
          %v395 = vlaneseq
          %v396 = vshrl.u32 %v395, 7
          %v397 = vsub.s32 1, %v396
          %v398 = vrot.slane %v389, %v397
          %vm401 = vcmask 1040384
          %v402 = vsel %vm401, %v394, 0.0
          %v403 = vsel %vm401, %v398, 0.0
          %v404 = vadd.f32 %v402, %v403
          %405 = vadd.xlane.f32.xlu0 %v404
          %v406 = vpop.xlane.xlu0 %405
          %v407 = vrot.slane %v406, 4
          %v408 = vadd.f32 %v406, %v407
          %v409 = vrot.slane %v408, 2
          %v410 = vadd.f32 %v408, %v409
          %v411 = vrot.slane %v410, 1
          %v412 = vadd.f32 %v410, %v411
          %s413 = vtos %v412
          %v414 = vstv %s413
          %415 = vst [vmem:[%s217] sm:$0xff] %v414
        $region44: #{tpu_custom_call.1} parent=27 // pred_fallthru
          _
        %s416 = sand.u32 %s98, 1
        %s417 = scalar_lea.sflag [#allocation5], %s416
        %s418 = sand.u32 %s98, 1
        %s419 = smul.addr %s418, 8
        %s420 = scalar_lea.vmem [#allocation8], %s419
        // Predicated region
        $region45: #{tpu_custom_call.1} parent=27 // pred_check
          %p421 = pneg %p108
        $region46: #{tpu_custom_call.1} parent=27 // pred_check_branch
          %423 = sbr.rel (%p421) target = $region48
        $region47: #{tpu_custom_call.1} parent=27 // pred_region
          %s425 = ssub.s32 128, 128
          %426 = vsyncadd %s417, %s425
          %s427 = smul.addr %s26, 128
          %s428 = scalar_lea.hbm %s2, %s427
          %s430 = sshll.u32 %s420, 4
          %s431 = int_to_ptr.vmem [resolvable:$true] %s430
          %433 = dma.vmem_to_hbm [thread:$0]  %s431, 128, %s428, %s417
        $region48: #{tpu_custom_call.1} parent=27 // pred_fallthru
          _
      $region28: #{tpu_custom_call.1} parent=5 // pred_fallthru
        _
      %p434 = scmp.le.s32.totalorder 2, %s17
      // Predicated region
      $region49: #{tpu_custom_call.1} parent=5 // pred_check
        %p435 = pneg %p434
      $region50: #{tpu_custom_call.1} parent=5 // pred_check_branch
        %437 = sbr.rel (%p435) target = $region52
      $region51: #{tpu_custom_call.1} parent=5 // pred_region
        %s438 = ssub.s32 %s17, 2
        // Predicated region
        $region53: #{tpu_custom_call.1} parent=51 // pred_check
          %p439 = pneg %p114
        $region54: #{tpu_custom_call.1} parent=51 // pred_check_branch
          %441 = sbr.rel (%p439) target = $region56
        $region55: #{tpu_custom_call.1} parent=51 // pred_region
          %s442 = sand.u32 %s99, 1
          %s443 = scalar_lea.sflag [#allocation5], %s442
          %s444 = sand.u32 %s99, 1
          %s445 = smul.addr %s444, 8
          %s446 = scalar_lea.vmem [#allocation8], %s445
          %447 = dma.done %s443, 128
        $region56: #{tpu_custom_call.1} parent=51 // pred_fallthru
          _
      $region52: #{tpu_custom_call.1} parent=5 // pred_fallthru
        _
    $region6: #{tpu_custom_call.1} parent=1 // loop_footer
      %s21 = sadd.s32 1, %s17
    $region7: #{tpu_custom_call.1} parent=1 // loop_footer_branch
      %16 = sbr.rel target = $region3
    $region8: #{tpu_custom_call.1} parent=1 // loop_exit
      _
    %448 = vsyncpa [#allocation4], 1
    %s449 = scalar_lea.sflag [#allocation4], 1
    %450 = vsyncpa %s449, 1
    %451 = vsyncpa [#allocation7], 1
    %s452 = scalar_lea.sflag [#allocation7], 1
    %453 = vsyncpa %s452, 1
    %454 = vsyncpa [#allocation5], 1
    %s455 = scalar_lea.sflag [#allocation5], 1
    %456 = vsyncpa %s455, 1

</llo_original>
